<compile_context>
chip_gen: v5e
topology: v5e:2x2
jax: 0.10.0
libtpu: 0.0.40
codegen_flags: <defaults>
</compile_context>

<pallas_src>
import functools

import jax
import jax.numpy as jnp
from jax.experimental import pallas as pl
from jax.experimental.pallas import tpu as pltpu

LANES = 128
SUBLANES = 8
NUM_SPLITS = 2            # leading "parallel" axis (2 TensorCores on v7x)
MAX_BLOCK_ROWS = 512      # (512, 128) f32 tile = 256 KiB per input per buffer
SMALL_N_THRESHOLD = 1024  # below this, fused XLA is faster than a kernel launch


def _round_up(x, m):
    return ((x + m - 1) // m) * m


def _svm_loss_kernel(out_ref, lab_ref, part_ref, acc_ref, *, inv_n):
    # out_ref, lab_ref: (block_rows, 128) f32 tiles in VMEM
    # part_ref:         (8, 128) f32 output block for this split
    # acc_ref:          (block_rows, 128) f32 persistent accumulator
    j = pl.program_id(1)

    @pl.when(j == 0)
    def _init():
        acc_ref[...] = jnp.zeros_like(acc_ref)

    # Hot path: pure VPU element-wise work, accumulated element-wise.
    hinge = jnp.maximum(1.0 - out_ref[...] * lab_ref[...], 0.0)
    acc_ref[...] += hinge

    @pl.when(j == pl.num_programs(1) - 1)
    def _finalize():
        # Single full reduction + fold /n into a multiply, only once per split.
        part = jnp.sum(acc_ref[...]) * inv_n
        part_ref[...] = jnp.broadcast_to(part, (SUBLANES, LANES)).astype(jnp.float32)


def svm_loss(outputs, labels):
    """outputs: (N, 1) f32 scores, labels: (N,) f32 in {-1, +1}. Returns scalar."""
    n = labels.shape[0]

    out_flat = outputs.astype(jnp.float32).reshape(-1)
    lab_flat = labels.astype(jnp.float32).reshape(-1)

    # Tiny-N fallback: kernel launch overhead dominates; XLA fuses this trivially.
    if n < SMALL_N_THRESHOLD:
        return jnp.sum(jnp.maximum(1.0 - out_flat * lab_flat, 0.0)) / n

    # ---- tiling geometry -------------------------------------------------
    rows_needed = -(-n // LANES)                              # ceil(n / 128)
    rows_per_split_needed = -(-rows_needed // NUM_SPLITS)
    block_rows = min(MAX_BLOCK_ROWS, _round_up(rows_per_split_needed, SUBLANES))
    blocks_per_split = -(-rows_per_split_needed // block_rows)
    rows_per_split = blocks_per_split * block_rows
    rows_padded = NUM_SPLITS * rows_per_split
    n_padded = rows_padded * LANES

    # ---- pad so padded elements contribute zero hinge: 1 - 1*2 = -1 -> 0 --
    pad = n_padded - n
    if pad:
        out_flat = jnp.concatenate(
            [out_flat, jnp.ones((pad,), jnp.float32)])
        lab_flat = jnp.concatenate(
            [lab_flat, jnp.full((pad,), 2.0, jnp.float32)])

    out2d = out_flat.reshape(rows_padded, LANES)
    lab2d = lab_flat.reshape(rows_padded, LANES)

    in_idx = lambda c, j: (c * blocks_per_split + j, 0)
    kernel = functools.partial(_svm_loss_kernel, inv_n=1.0 / n)

    partials = pl.pallas_call(
        kernel,
        out_shape=jax.ShapeDtypeStruct((NUM_SPLITS * SUBLANES, LANES),
                                       jnp.float32),
        grid_spec=pltpu.PrefetchScalarGridSpec(
            num_scalar_prefetch=0,
            grid=(NUM_SPLITS, blocks_per_split),
            in_specs=[
                pl.BlockSpec((block_rows, LANES), in_idx),
                pl.BlockSpec((block_rows, LANES), in_idx),
            ],
            out_specs=pl.BlockSpec((SUBLANES, LANES), lambda c, j: (c, 0)),
            scratch_shapes=[pltpu.VMEM((block_rows, LANES), jnp.float32)],
        ),
        compiler_params=pltpu.CompilerParams(
            dimension_semantics=("parallel", "arbitrary")),
    )(out2d, lab2d)

    # One (already 1/n-scaled) partial per split, broadcast over its (8,128)
    # block: pick element [c*8, 0] of each split and add.
    return jnp.sum(partials[::SUBLANES, 0])


if __name__ == "__main__":
    key = jax.random.PRNGKey(0)
    k1, k2 = jax.random.split(key)

    # Main test: big enough to take the Pallas kernel path and exercise
    # padding (3000 is not a multiple of 128).
    N = 3000
    outputs = jax.random.normal(k1, (N, 1), dtype=jnp.float32)
    labels = jnp.where(
        jax.random.bernoulli(k2, 0.5, (N,)), 1.0, -1.0
    ).astype(jnp.float32)

    loss = jax.block_until_ready(svm_loss(outputs, labels))
    ref = jnp.sum(jnp.maximum(1.0 - outputs.T * labels, 0.0)) / N
    assert jnp.allclose(loss, ref, rtol=1e-5, atol=1e-6), (loss, ref)

    # Tiny-N fallback path (matches the original module's toy usage).
    Ns = 8
    out_s, lab_s = outputs[:Ns], labels[:Ns]
    loss_s = jax.block_until_ready(svm_loss(out_s, lab_s))
    ref_s = jnp.sum(jnp.maximum(1.0 - out_s.T * lab_s, 0.0)) / Ns
    assert jnp.allclose(loss_s, ref_s, rtol=1e-6, atol=1e-6), (loss_s, ref_s)

    print("KERNEL_OK")
</pallas_src>

<mosaic_0001>
module attributes {stable_mosaic.version = 11 : i64} {
  func.func @_svm_loss_kernel(%arg0: i32, %arg1: i32, %arg2: memref<16x128xf32, #tpu.memory_space<vmem>>, %arg3: memref<16x128xf32, #tpu.memory_space<vmem>>, %arg4: memref<8x128xf32, #tpu.memory_space<vmem>>, %arg5: memref<16x128xf32, #tpu.memory_space<vmem>>) attributes {dimension_semantics = [#tpu.dimension_semantics<parallel>, #tpu.dimension_semantics<arbitrary>], iteration_bounds = array<i64: 2, 1>, scalar_prefetch = 0 : i64, scratch_operands = 1 : i64, tpu.core_type = #tpu.core_type<tc>, window_params = [{transform_indices = @transform_0, window_bounds = array<i64: 16, 128>}, {transform_indices = @transform_1, window_bounds = array<i64: 16, 128>}, {transform_indices = @transform_2, window_bounds = array<i64: 8, 128>}]} {
    %c0_i32 = arith.constant 0 : i32
    %0 = arith.cmpi eq, %arg1, %c0_i32 : i32
    %1 = arith.extui %0 : i1 to i32
    %c0_i32_0 = arith.constant 0 : i32
    %2 = arith.cmpi ne, %1, %c0_i32_0 : i32
    scf.if %2 {
      %cst_11 = arith.constant 0.000000e+00 : f32
      %16 = vector.broadcast %cst_11 : f32 to vector<16x128xf32>
      %c0_12 = arith.constant 0 : index
      %c0_13 = arith.constant 0 : index
      %17 = vector.load %arg5[%c0_12, %c0_13] : memref<16x128xf32, #tpu.memory_space<vmem>>, vector<16x128xf32>
      tpu.vector_store %arg5[%c0_12, %c0_13], %16 {strides = array<i32>} : memref<16x128xf32, #tpu.memory_space<vmem>>, vector<16x128xf32>,
    } else {
    }
    %c0 = arith.constant 0 : index
    %c0_1 = arith.constant 0 : index
    %3 = vector.load %arg2[%c0, %c0_1] : memref<16x128xf32, #tpu.memory_space<vmem>>, vector<16x128xf32>
    %c0_2 = arith.constant 0 : index
    %c0_3 = arith.constant 0 : index
    %4 = vector.load %arg3[%c0_2, %c0_3] : memref<16x128xf32, #tpu.memory_space<vmem>>, vector<16x128xf32>
    %5 = arith.mulf %3, %4 : vector<16x128xf32>
    %cst = arith.constant 1.000000e+00 : f32
    %6 = vector.broadcast %cst : f32 to vector<16x128xf32>
    %7 = arith.subf %6, %5 : vector<16x128xf32>
    %cst_4 = arith.constant 0.000000e+00 : f32
    %8 = vector.broadcast %cst_4 : f32 to vector<16x128xf32>
    %9 = arith.maximumf %7, %8 : vector<16x128xf32>
    %c0_5 = arith.constant 0 : index
    %c0_6 = arith.constant 0 : index
    %10 = vector.load %arg5[%c0_5, %c0_6] : memref<16x128xf32, #tpu.memory_space<vmem>>, vector<16x128xf32>
    %11 = arith.addf %10, %9 : vector<16x128xf32>
    %c0_7 = arith.constant 0 : index
    %c0_8 = arith.constant 0 : index
    %12 = vector.load %arg5[%c0_7, %c0_8] : memref<16x128xf32, #tpu.memory_space<vmem>>, vector<16x128xf32>
    tpu.vector_store %arg5[%c0_7, %c0_8], %11 {strides = array<i32>} : memref<16x128xf32, #tpu.memory_space<vmem>>, vector<16x128xf32>,
    %c0_i32_9 = arith.constant 0 : i32
    %13 = arith.cmpi eq, %arg1, %c0_i32_9 : i32
    %14 = arith.extui %13 : i1 to i32
    %c0_i32_10 = arith.constant 0 : i32
    %15 = arith.cmpi ne, %14, %c0_i32_10 : i32
    scf.if %15 {
      %c0_11 = arith.constant 0 : index
      %c0_12 = arith.constant 0 : index
      %16 = vector.load %arg5[%c0_11, %c0_12] : memref<16x128xf32, #tpu.memory_space<vmem>>, vector<16x128xf32>
      %17 = vector.shape_cast %16 : vector<16x128xf32> to vector<1x16x128xf32>
      %cst_13 = arith.constant dense<0.000000e+00> : vector<1xf32>
      %18 = vector.multi_reduction <add>, %17, %cst_13 [1, 2] : vector<1x16x128xf32> to vector<1xf32>
      %19 = vector.shape_cast %18 : vector<1xf32> to vector<1x1x1xf32>
      %20 = vector.extract %19[0, 0, 0] : f32 from vector<1x1x1xf32>
      %cst_14 = arith.constant 3.3333333E-4 : f32
      %21 = arith.mulf %20, %cst_14 : f32
      %22 = vector.broadcast %21 : f32 to vector<8x128xf32>
      %c0_15 = arith.constant 0 : index
      %c0_16 = arith.constant 0 : index
      %23 = vector.load %arg4[%c0_15, %c0_16] : memref<8x128xf32, #tpu.memory_space<vmem>>, vector<8x128xf32>
      tpu.vector_store %arg4[%c0_15, %c0_16], %22 {strides = array<i32>} : memref<8x128xf32, #tpu.memory_space<vmem>>, vector<8x128xf32>,
    } else {
    }
    return
  }
  func.func @transform_0(%arg0: i32, %arg1: i32) -> (i32, i32) {
    %c1_i32 = arith.constant 1 : i32
    %0 = arith.muli %arg0, %c1_i32 : i32
    %1 = arith.addi %0, %arg1 : i32
    %c0_i32 = arith.constant 0 : i32
    %c0_i32_0 = arith.constant 0 : i32
    return %1, %c0_i32 : i32, i32
  }
  func.func @transform_1(%arg0: i32, %arg1: i32) -> (i32, i32) {
    %c1_i32 = arith.constant 1 : i32
    %0 = arith.muli %arg0, %c1_i32 : i32
    %1 = arith.addi %0, %arg1 : i32
    %c0_i32 = arith.constant 0 : i32
    %c0_i32_0 = arith.constant 0 : i32
    return %1, %c0_i32 : i32, i32
  }
  func.func @transform_2(%arg0: i32, %arg1: i32) -> (i32, i32) {
    %c0_i32 = arith.constant 0 : i32
    %c0_i32_0 = arith.constant 0 : i32
    return %arg0, %c0_i32 : i32, i32
  }
}

</mosaic_0001>

<llo_original>
// kernel: tpu_custom_call.1
$region0: #{tpu_custom_call.1}
  #allocation0 [shape = 'u32[]', space=smem, size = 0x4, offset = 0x4, fixed_abs, tag = 'smem constant byte address 0x4 - core index']
  #allocation1 [shape = 'u32[72,128]{1,0:T(1,128)}', space=vmem, size = 0x9000, scoped, tag = 'internal scratch']
  #allocation2 [shape = 'f32[16,128]{1,0:T(8,128)}', space=vmem, size = 0x2000, scoped, tag = 'scratch operand']
  %s0 = inlined_call_operand.hbm [shape: f32[32,128], index: 0, kind: input, shape index: {}]
  %s1 = inlined_call_operand.hbm [shape: f32[32,128], index: 1, kind: input, shape index: {}]
  %s2 = inlined_call_operand.hbm [shape: f32[16,128], index: 2, kind: output, shape index: {}]
  %s3 = sld [smem:[#allocation0]]
  $region57: #{tpu_custom_call.1} parent=0
    _
  %s5 = ssub.s32 1, %s3
  %s6 = scalar_select 0, %s5, %s3
  $region1: #{tpu_custom_call.1} parent=0
    #allocation3 [shape = 'u8[16384]{0}', space=vmem, size = 0x4000, scoped, tag = 'input window, operand 0']
    #allocation4 [shape = 's32[2]{0}', space=sflag, size = 0x8, scoped, tag = 'scoped memory for tpu_custom_call.1']
    #allocation5 [shape = 's32[2]{0}', space=sflag, size = 0x8, scoped, tag = 'scoped memory for tpu_custom_call.1']
    #allocation6 [shape = 'u8[16384]{0}', space=vmem, size = 0x4000, scoped, tag = 'input window, operand 1']
    #allocation7 [shape = 's32[2]{0}', space=sflag, size = 0x8, scoped, tag = 'scoped memory for tpu_custom_call.1']
    #allocation8 [shape = 'u8[8192]{0}', space=vmem, size = 0x2000, scoped, tag = 'output window, operand 0']
    %7 = vsyncpa [#allocation4], 0
    %s8 = scalar_lea.sflag [#allocation4], 1
    %9 = vsyncpa %s8, 0
    %10 = vsyncpa [#allocation7], 0
    %s11 = scalar_lea.sflag [#allocation7], 1
    %12 = vsyncpa %s11, 0
    %13 = vsyncpa [#allocation5], 0
    %s14 = scalar_lea.sflag [#allocation5], 1
    %15 = vsyncpa %s14, 0
    loop: start=0, step=1, limit=4
    $region2: #{tpu_custom_call.1} parent=1 // loop_pre_header
      _
    $region3: #{tpu_custom_call.1} parent=1 // loop_header
      %s17 = sphi 0, %s21
      %p18 = scmp.ge.s32.totalorder %s17, 4
      %s24 = sphi 0, %s36
      %s25 = sphi 0, %s32
      %s26 = sphi 0, %s24
      %s27 = sphi 0, %s25
      %s28 = sphi 0, %s26
      %s29 = sphi 0, %s27
      %s41 = sphi 0, %s43
      %s44 = sphi 0, %s41
      %s45 = sphi 0, %s44
      %s61 = sphi 0, %s45
      %s69 = sphi 0, %s71
      %s72 = sphi 0, %s69
      %s73 = sphi 0, %s72
      %s89 = sphi 0, %s73
      %s95 = sphi 0, %s97
      %s98 = sphi 0, %s95
      %s99 = sphi 0, %s98
      %s115 = sphi 0, %s99
    $region4: #{tpu_custom_call.1} parent=1 // loop_header_branch
      %20 = sbr.rel (%p18) target = $region8
    $region5: #{tpu_custom_call.1} parent=1 // loop_body
      %s22 = ssub.s32 %s17, 1
      %s23 = ssub.s32 %s17, 2
      %s30 = sadd.s32 1, %s25
      %p31 = scmp.ge.s32.totalorder %s30, 1
      %s32 = scalar_select %p31, 0, %s30
      %s33 = sadd.s32 1, %s24
      %s34 = scalar_select %p31, %s33, %s24
      %p35 = scmp.ge.s32.totalorder %s34, 2
      %s36 = scalar_select %p35, 0, %s34
      %s37 = sadd.s32 %s24, %s25
      %s38 = sadd.s32 %s36, %s32
      %s39 = ssub.s32 %s37, %s38
      %p40 = scmp.eq.s32.totalorder %s39, 0
      %s42 = sadd.s32 %s41, 1
      %s43 = scalar_select %p40, %s41, %s42
      %p46 = pneg %p40
      %p47 = scmp.eq.s32.totalorder %s17, 1
      %p48 = por %p46, %p47
      %p49 = scmp.ne.s32.totalorder %s41, %s44
      %p50 = scmp.eq.s32.totalorder %s17, 0
      %p51 = por %p49, %p50
      %p52 = scmp.ne.s32.totalorder %s41, %s44
      %p53 = scmp.eq.s32.totalorder %s22, 1
      %p54 = por %p52, %p53
      %p55 = scmp.ne.s32.totalorder %s44, %s45
      %p56 = scmp.eq.s32.totalorder %s22, 0
      %p57 = por %p55, %p56
      %p58 = scmp.ne.s32.totalorder %s44, %s45
      %p59 = scmp.eq.s32.totalorder %s23, 1
      %p60 = por %p58, %p59
      %p62 = scmp.ne.s32.totalorder %s45, %s61
      %p63 = scmp.eq.s32.totalorder %s23, 0
      %p64 = por %p62, %p63
      %s65 = sadd.s32 %s24, %s25
      %s66 = sadd.s32 %s36, %s32
      %s67 = ssub.s32 %s65, %s66
      %p68 = scmp.eq.s32.totalorder %s67, 0
      %s70 = sadd.s32 %s69, 1
      %s71 = scalar_select %p68, %s69, %s70
      %p74 = pneg %p68
      %p75 = scmp.eq.s32.totalorder %s17, 1
      %p76 = por %p74, %p75
      %p77 = scmp.ne.s32.totalorder %s69, %s72
      %p78 = scmp.eq.s32.totalorder %s17, 0
      %p79 = por %p77, %p78
      %p80 = scmp.ne.s32.totalorder %s69, %s72
      %p81 = scmp.eq.s32.totalorder %s22, 1
      %p82 = por %p80, %p81
      %p83 = scmp.ne.s32.totalorder %s72, %s73
      %p84 = scmp.eq.s32.totalorder %s22, 0
      %p85 = por %p83, %p84
      %p86 = scmp.ne.s32.totalorder %s72, %s73
      %p87 = scmp.eq.s32.totalorder %s23, 1
      %p88 = por %p86, %p87
      %p90 = scmp.ne.s32.totalorder %s73, %s89
      %p91 = scmp.eq.s32.totalorder %s23, 0
      %p92 = por %p90, %p91
      %s93 = ssub.s32 %s24, %s36
      %p94 = scmp.eq.s32.totalorder %s93, 0
      %s96 = sadd.s32 %s95, 1
      %s97 = scalar_select %p94, %s95, %s96
      %p100 = pneg %p94
      %p101 = scmp.eq.s32.totalorder %s17, 1
      %p102 = por %p100, %p101
      %p103 = scmp.ne.s32.totalorder %s95, %s98
      %p104 = scmp.eq.s32.totalorder %s17, 0
      %p105 = por %p103, %p104
      %p106 = scmp.ne.s32.totalorder %s95, %s98
      %p107 = scmp.eq.s32.totalorder %s22, 1
      %p108 = por %p106, %p107
      %p109 = scmp.ne.s32.totalorder %s98, %s99
      %p110 = scmp.eq.s32.totalorder %s22, 0
      %p111 = por %p109, %p110
      %p112 = scmp.ne.s32.totalorder %s98, %s99
      %p113 = scmp.eq.s32.totalorder %s23, 1
      %p114 = por %p112, %p113
      %p116 = scmp.ne.s32.totalorder %s99, %s115
      %p117 = scmp.eq.s32.totalorder %s23, 0
      %p118 = por %p116, %p117
      %p119 = scmp.le.s32.totalorder 1, %s17
      %p120 = scmp.lt.s32.totalorder %s17, 3
      %p121 = pnand %p119, %p120
      %p122 = pneg %p121
      // Predicated region
      $region9: #{tpu_custom_call.1} parent=5 // pred_check
        _
      $region10: #{tpu_custom_call.1} parent=5 // pred_check_branch
        %124 = sbr.rel (%p121) target = $region12
      $region11: #{tpu_custom_call.1} parent=5 // pred_region
        %s125 = ssub.s32 %s17, 1
      $region12: #{tpu_custom_call.1} parent=5 // pred_fallthru
        _
      %p126 = scmp.lt.s32.totalorder %s17, 2
      // Predicated region
      $region13: #{tpu_custom_call.1} parent=5 // pred_check
        %p127 = pneg %p126
      $region14: #{tpu_custom_call.1} parent=5 // pred_check_branch
        %129 = sbr.rel (%p127) target = $region16
      $region15: #{tpu_custom_call.1} parent=5 // pred_region
        // Predicated region
        $region17: #{tpu_custom_call.1} parent=15 // pred_check
          %p130 = pneg %p51
        $region18: #{tpu_custom_call.1} parent=15 // pred_check_branch
          %132 = sbr.rel (%p130) target = $region20
        $region19: #{tpu_custom_call.1} parent=15 // pred_region
          %s133 = sand.u32 %s41, 1
          %s134 = scalar_lea.sflag [#allocation4], %s133
          %s135 = sand.u32 %s41, 1
          %s136 = smul.addr %s135, 16
          %s137 = scalar_lea.vmem [#allocation3], %s136
          %s138 = sadd.s32 %s24, %s25
          %s139 = smul.u32 2, %s138
          %141 = vsyncadd %s134, 0
          %s142 = smul.addr %s139, 8
          %s143 = scalar_lea.hbm %s0, %s142
          %s144 = sshll.u32 %s143, 4
          %s145 = int_to_ptr.hbm [resolvable:$true] %s144
          %s146 = sshll.u32 %s137, 4
          %s147 = int_to_ptr.vmem [resolvable:$true] %s146
          %152 = dma.hbm_to_vmem [thread:$0]  %s145, 256, %s147, %s134, 128, 128, 8
        $region20: #{tpu_custom_call.1} parent=15 // pred_fallthru
          _
        // Predicated region
        $region21: #{tpu_custom_call.1} parent=15 // pred_check
          %p153 = pneg %p79
        $region22: #{tpu_custom_call.1} parent=15 // pred_check_branch
          %155 = sbr.rel (%p153) target = $region24
        $region23: #{tpu_custom_call.1} parent=15 // pred_region
          %s156 = sand.u32 %s69, 1
          %s157 = scalar_lea.sflag [#allocation7], %s156
          %s158 = sand.u32 %s69, 1
          %s159 = smul.addr %s158, 16
          %s160 = scalar_lea.vmem [#allocation6], %s159
          %s161 = sadd.s32 %s24, %s25
          %s162 = smul.u32 2, %s161
          %164 = vsyncadd %s157, 0
          %s165 = smul.addr %s162, 8
          %s166 = scalar_lea.hbm %s1, %s165
          %s167 = sshll.u32 %s166, 4
          %s168 = int_to_ptr.hbm [resolvable:$true] %s167
          %s169 = sshll.u32 %s160, 4
          %s170 = int_to_ptr.vmem [resolvable:$true] %s169
          %175 = dma.hbm_to_vmem [thread:$0]  %s168, 256, %s170, %s157, 128, 128, 8
        $region24: #{tpu_custom_call.1} parent=15 // pred_fallthru
          _
      $region16: #{tpu_custom_call.1} parent=5 // pred_fallthru
        _
      %p176 = scmp.le.s32.totalorder 1, %s17
      %p177 = scmp.lt.s32.totalorder %s17, 3
      %p178 = pnand %p176, %p177
      %p179 = pneg %p178
      // Predicated region
      $region25: #{tpu_custom_call.1} parent=5 // pred_check
        _
      $region26: #{tpu_custom_call.1} parent=5 // pred_check_branch
        %181 = sbr.rel (%p178) target = $region28
      $region27: #{tpu_custom_call.1} parent=5 // pred_region
        %s182 = ssub.s32 %s17, 1
        %s183 = sand.u32 %s44, 1
        %s184 = scalar_lea.sflag [#allocation4], %s183
        %s185 = sand.u32 %s44, 1
        %s186 = smul.addr %s185, 16
        %s187 = scalar_lea.vmem [#allocation3], %s186
        // Predicated region
        $region29: #{tpu_custom_call.1} parent=27 // pred_check
          %p188 = pneg %p57
        $region30: #{tpu_custom_call.1} parent=27 // pred_check_branch
          %190 = sbr.rel (%p188) target = $region32
        $region31: #{tpu_custom_call.1} parent=27 // pred_region
          %192 = dma.done %s184, 256
        $region32: #{tpu_custom_call.1} parent=27 // pred_fallthru
          _
        %s193 = sand.u32 %s72, 1
        %s194 = scalar_lea.sflag [#allocation7], %s193
        %s195 = sand.u32 %s72, 1
        %s196 = smul.addr %s195, 16
        %s197 = scalar_lea.vmem [#allocation6], %s196
        // Predicated region
        $region33: #{tpu_custom_call.1} parent=27 // pred_check
          %p198 = pneg %p85
        $region34: #{tpu_custom_call.1} parent=27 // pred_check_branch
          %200 = sbr.rel (%p198) target = $region36
        $region35: #{tpu_custom_call.1} parent=27 // pred_region
          %202 = dma.done %s194, 256
        $region36: #{tpu_custom_call.1} parent=27 // pred_fallthru
          _
        %s203 = sand.u32 %s44, 1
        %s204 = scalar_lea.sflag [#allocation4], %s203
        %s205 = sand.u32 %s44, 1
        %s206 = smul.addr %s205, 16
        %s207 = scalar_lea.vmem [#allocation3], %s206
        %p208 = pneg %p57
        %p209 = pneg %p54
        %s210 = sand.u32 %s72, 1
        %s211 = scalar_lea.sflag [#allocation7], %s210
        %s212 = sand.u32 %s72, 1
        %s213 = smul.addr %s212, 16
        %s214 = scalar_lea.vmem [#allocation6], %s213
        %p215 = pneg %p85
        %p216 = pneg %p82
        %p217 = pneg %p111
        %p218 = pneg %p108
        %s219 = sand.u32 %s98, 1
        %s220 = scalar_lea.sflag [#allocation5], %s219
        %s221 = sand.u32 %s98, 1
        %s222 = smul.addr %s221, 8
        %s223 = scalar_lea.vmem [#allocation8], %s222
        %s224 = sadd.s32 %s26, %s27
        %s225 = smul.u32 2, %s224
        %s226 = sadd.s32 %s26, %s27
        %s227 = smul.u32 2, %s226
        %p228 = scmp.eq.s32.totalorder %s27, 0
        // Predicated region
        $region37: #{tpu_custom_call.1} parent=27 // pred_check
          %p229 = pneg %p228
        $region38: #{tpu_custom_call.1} parent=27 // pred_check_branch
          %231 = sbr.rel (%p229) target = $region40
        $region39: #{tpu_custom_call.1} parent=27 // pred_region
          %232 = vst [vmem:[#allocation2] sm:$0xff] 0.0
          %233 = vst [vmem:[#allocation2 + $0x8] sm:$0xff] 0.0
        $region40: #{tpu_custom_call.1} parent=27 // pred_fallthru
          _
        %v234 = vld [vmem:[%s187] sm:$0xff]
        %v235 = vld [vmem:[%s187 + $0x8] sm:$0xff]
        %v236 = vld [vmem:[%s197] sm:$0xff]
        %v237 = vld [vmem:[%s197 + $0x8] sm:$0xff]
        %v238 = vmul.f32 %v234, %v236
        %v239 = vmul.f32 %v235, %v237
        %v240 = vsub.f32 1.0, %v238
        %v241 = vsub.f32 1.0, %v239
        %v242 = vmax.f32 %v240, 0.0
        %v243 = vmax.f32 %v241, 0.0
        %v244 = vld [vmem:[#allocation2] sm:$0xff]
        %v245 = vld [vmem:[#allocation2 + $0x8] sm:$0xff]
        %v246 = vadd.f32 %v244, %v242
        %v247 = vadd.f32 %v245, %v243
        %248 = vst [vmem:[#allocation2] sm:$0xff] %v246
        %249 = vst [vmem:[#allocation2 + $0x8] sm:$0xff] %v247
        // Predicated region
        $region41: #{tpu_custom_call.1} parent=27 // pred_check
          %p250 = pneg %p228
        $region42: #{tpu_custom_call.1} parent=27 // pred_check_branch
          %252 = sbr.rel (%p250) target = $region44
        $region43: #{tpu_custom_call.1} parent=27 // pred_region
          %v253 = vld [vmem:[#allocation2] sm:$0xff]
          %v254 = vld [vmem:[#allocation2 + $0x8] sm:$0xff]
          %v255 = vadd.f32 %v253, %v254
          %256 = vadd.xlane.f32.xlu0 %v255
          %v257 = vpop.xlane.xlu0 %256
          %v258 = vrot.slane %v257, 4
          %v259 = vadd.f32 %v257, %v258
          %v260 = vrot.slane %v259, 2
          %v261 = vadd.f32 %v259, %v260
          %v262 = vrot.slane %v261, 1
          %v263 = vadd.f32 %v261, %v262
          %s264 = vtos %v263
          %s265 = smul.f32 %s264, 0.00033333333
          %v266 = vstv %s265
          %267 = vst [vmem:[%s223] sm:$0xff] %v266
        $region44: #{tpu_custom_call.1} parent=27 // pred_fallthru
          _
        %s268 = sand.u32 %s98, 1
        %s269 = scalar_lea.sflag [#allocation5], %s268
        %s270 = sand.u32 %s98, 1
        %s271 = smul.addr %s270, 8
        %s272 = scalar_lea.vmem [#allocation8], %s271
        // Predicated region
        $region45: #{tpu_custom_call.1} parent=27 // pred_check
          %p273 = pneg %p108
        $region46: #{tpu_custom_call.1} parent=27 // pred_check_branch
          %275 = sbr.rel (%p273) target = $region48
        $region47: #{tpu_custom_call.1} parent=27 // pred_region
          %277 = vsyncadd %s269, 0
          %s278 = smul.addr %s26, 8
          %s279 = scalar_lea.hbm %s2, %s278
          %s281 = sshll.u32 %s272, 4
          %s282 = int_to_ptr.vmem [resolvable:$true] %s281
          %s283 = sshll.u32 %s279, 4
          %s284 = int_to_ptr.hbm [resolvable:$true] %s283
          %286 = dma.vmem_to_hbm [thread:$0]  %s282, 128, %s284, %s269
        $region48: #{tpu_custom_call.1} parent=27 // pred_fallthru
          _
      $region28: #{tpu_custom_call.1} parent=5 // pred_fallthru
        _
      %p287 = scmp.le.s32.totalorder 2, %s17
      // Predicated region
      $region49: #{tpu_custom_call.1} parent=5 // pred_check
        %p288 = pneg %p287
      $region50: #{tpu_custom_call.1} parent=5 // pred_check_branch
        %290 = sbr.rel (%p288) target = $region52
      $region51: #{tpu_custom_call.1} parent=5 // pred_region
        %s291 = ssub.s32 %s17, 2
        // Predicated region
        $region53: #{tpu_custom_call.1} parent=51 // pred_check
          %p292 = pneg %p114
        $region54: #{tpu_custom_call.1} parent=51 // pred_check_branch
          %294 = sbr.rel (%p292) target = $region56
        $region55: #{tpu_custom_call.1} parent=51 // pred_region
          %s295 = sand.u32 %s99, 1
          %s296 = scalar_lea.sflag [#allocation5], %s295
          %s297 = sand.u32 %s99, 1
          %s298 = smul.addr %s297, 8
          %s299 = scalar_lea.vmem [#allocation8], %s298
          %301 = dma.done %s296, 128
        $region56: #{tpu_custom_call.1} parent=51 // pred_fallthru
          _
      $region52: #{tpu_custom_call.1} parent=5 // pred_fallthru
        _
    $region6: #{tpu_custom_call.1} parent=1 // loop_footer
      %s21 = sadd.s32 1, %s17
    $region7: #{tpu_custom_call.1} parent=1 // loop_footer_branch
      %16 = sbr.rel target = $region3
    $region8: #{tpu_custom_call.1} parent=1 // loop_exit
      _
    %302 = vsyncpa [#allocation4], 1
    %s303 = scalar_lea.sflag [#allocation4], 1
    %304 = vsyncpa %s303, 1
    %305 = vsyncpa [#allocation7], 1
    %s306 = scalar_lea.sflag [#allocation7], 1
    %307 = vsyncpa %s306, 1
    %308 = vsyncpa [#allocation5], 1
    %s309 = scalar_lea.sflag [#allocation5], 1
    %310 = vsyncpa %s309, 1

</llo_original>
